<compile_context>
chip_gen: v5e
topology: v5e:2x2
jax: 0.10.0
libtpu: 0.0.40
codegen_flags: <defaults>
</compile_context>

<pallas_src>
import jax
import jax.numpy as jnp
from jax.experimental import pallas as pl
from jax.experimental.pallas import tpu as pltpu

h_dim = 128
y_dim = 10


def _round_up(n, m):
    return ((n + m - 1) // m) * m


def _disc_kernel(inp_ref, w1_ref, b1_ref, w2_ref, b2_ref, out_ref):
    # fc1: one fused K=(x_dim+y_dim) contraction on the MXU.
    h = jnp.dot(inp_ref[...], w1_ref[...], preferred_element_type=jnp.float32)
    h = jnp.maximum(h + b1_ref[...], 0.0)                      # (tb, h_dim)

    # fc2 (single output unit): VPU multiply + lane reduction with w2 stored as
    # a (1, h_dim) row vector; b2 is an SMEM scalar.  Result keeps batch on
    # sublanes -> store directly as (tb, 1), no XLU relayout.
    logit = jnp.sum(h * w2_ref[...], axis=-1, keepdims=True) + b2_ref[0]
    out_ref[...] = jax.nn.sigmoid(logit).astype(out_ref.dtype)  # (tb, 1)


def discriminator_forward(x, y, params, *, tb=None):
    """x: (B, x_dim) f32, y: (B, y_dim) f32 -> (B, 1) f32."""
    w1, b1, w2, b2 = params
    B = x.shape[0]
    in_dim = w1.shape[0]

    # Pack [x | y] once, lane-contiguously, so fc1 is a single K=in_dim dot.
    inp = jnp.concatenate([x, y], axis=1).astype(jnp.float32)
    assert inp.shape[1] == in_dim

    # Batch-tile selection:
    #  * small/medium batches: a single tile, rounded up to the 8-sublane
    #    granularity (no huge padding waste for tiny B).
    #  * large batches: ~4K-row tiles with an EVEN tile count so the
    #    "parallel" batch axis splits evenly across v7x's two TensorCores.
    if tb is None:
        if B <= 4096:
            tb = _round_up(B, 8)
        else:
            n_even = 2 * pl.cdiv(B, 2 * 4096)          # even number of tiles
            tb = _round_up(pl.cdiv(B, n_even), 128)

    n_tiles = pl.cdiv(B, tb)
    b_pad = n_tiles * tb
    if b_pad != B:
        # Padded rows produce sigmoid(relu(b1)·w2 + b2); sliced off below.
        inp = jnp.pad(inp, ((0, b_pad - B), (0, 0)))

    resident = lambda i: (0, 0)   # weights/biases: same block every grid step

    out = pl.pallas_call(
        _disc_kernel,
        out_shape=jax.ShapeDtypeStruct((b_pad, 1), jnp.float32),
        grid=(n_tiles,),
        in_specs=[
            pl.BlockSpec((tb, in_dim), lambda i: (i, 0)),  # packed [x|y], batch-tiled
            pl.BlockSpec((in_dim, h_dim), resident),       # w1 (VMEM-resident)
            pl.BlockSpec((1, h_dim), resident),            # b1
            pl.BlockSpec((1, h_dim), resident),            # w2 (row vector)
            pl.BlockSpec(memory_space=pltpu.SMEM),         # b2 scalar in SMEM
        ],
        out_specs=pl.BlockSpec((tb, 1), lambda i: (i, 0)),
        compiler_params=pltpu.CompilerParams(
            dimension_semantics=("parallel",)),
    )(inp, w1, b1, w2, b2)

    return out[:B]


def init_params(key, x_dim, h_dim, y_dim):
    """Deterministic xavier_normal_ weights, zero biases (like the PyTorch init).

    Weight layout chosen for the kernel:
      w1: (x_dim + y_dim, h_dim)   (fc1 weight, already transposed for x@W)
      b1: (1, h_dim)
      w2: (1, h_dim)               (fc2 weight stored as a row vector)
      b2: (1,)                     (scalar bias; lives in SMEM inside the kernel)
    """
    k1, k2 = jax.random.split(key)
    in1 = x_dim + y_dim
    std1 = (2.0 / (in1 + h_dim)) ** 0.5
    std2 = (2.0 / (h_dim + 1)) ** 0.5
    w1 = std1 * jax.random.normal(k1, (in1, h_dim), dtype=jnp.float32)
    b1 = jnp.zeros((1, h_dim), dtype=jnp.float32)
    w2 = std2 * jax.random.normal(k2, (1, h_dim), dtype=jnp.float32)
    b2 = jnp.zeros((1,), dtype=jnp.float32)
    return w1, b1, w2, b2


def _reference(x, y, params):
    w1, b1, w2, b2 = params
    inp = jnp.concatenate([x, y], axis=1)
    h = jnp.maximum(inp @ w1 + b1, 0.0)
    return jax.nn.sigmoid(h @ w2.T + b2)


if __name__ == "__main__":
    key = jax.random.PRNGKey(0)
    kx, ky, kp = jax.random.split(key, 3)

    B = 8
    x_dim = 32                                # small synthetic x_dim
    x = jax.random.normal(kx, (B, x_dim), dtype=jnp.float32)
    # one-hot labels, matching torch's float cat([x, y], dim=1) semantics
    y = jax.nn.one_hot(
        jax.random.randint(ky, (B,), 0, y_dim), y_dim, dtype=jnp.float32
    )

    params = init_params(kp, x_dim, h_dim, y_dim)

    out = discriminator_forward(x, y, params)
    jax.block_until_ready(out)

    ref = _reference(x, y, params)
    assert out.shape == (B, 1)
    assert jnp.allclose(out, ref, atol=1e-5, rtol=1e-5)

    print("KERNEL_OK")
</pallas_src>

<mosaic_0001>
module attributes {stable_mosaic.version = 11 : i64} {
  func.func @_disc_kernel(%arg0: i32, %arg1: memref<8x42xf32, #tpu.memory_space<vmem>>, %arg2: memref<42x128xf32, #tpu.memory_space<vmem>>, %arg3: memref<1x128xf32, #tpu.memory_space<vmem>>, %arg4: memref<1x128xf32, #tpu.memory_space<vmem>>, %arg5: memref<1xf32, #tpu.memory_space<smem>>, %arg6: memref<8x1xf32, #tpu.memory_space<vmem>>) attributes {dimension_semantics = [#tpu.dimension_semantics<parallel>], iteration_bounds = array<i64: 1>, scalar_prefetch = 0 : i64, scratch_operands = 0 : i64, tpu.core_type = #tpu.core_type<tc>, window_params = [{transform_indices = @transform_0, window_bounds = array<i64: 8, 42>}, {pipeline_mode = #tpu.pipeline_mode<synchronous>, transform_indices = @transform_1, window_bounds = array<i64: 42, 128>}, {pipeline_mode = #tpu.pipeline_mode<synchronous>, transform_indices = @transform_2, window_bounds = array<i64: 1, 128>}, {pipeline_mode = #tpu.pipeline_mode<synchronous>, transform_indices = @transform_3, window_bounds = array<i64: 1, 128>}, {transform_indices = @transform_4, window_bounds = array<i64: 1>}, {transform_indices = @transform_5, window_bounds = array<i64: 8, 1>}]} {
    %c0 = arith.constant 0 : index
    %c0_0 = arith.constant 0 : index
    %0 = vector.load %arg1[%c0, %c0_0] : memref<8x42xf32, #tpu.memory_space<vmem>>, vector<8x42xf32>
    %c0_1 = arith.constant 0 : index
    %c0_2 = arith.constant 0 : index
    %1 = vector.load %arg2[%c0_1, %c0_2] : memref<42x128xf32, #tpu.memory_space<vmem>>, vector<42x128xf32>
    %cst = arith.constant dense<0.000000e+00> : vector<8x128xf32>
    %2 = tpu.matmul %0, %1, %cst {dimension_numbers = #tpu.dot_dimension_numbers<[1], [0], [0], [1], [0, 0, 1, 1], [], []>} : vector<8x42xf32>, vector<42x128xf32>, vector<8x128xf32> -> vector<8x128xf32>
    %c0_3 = arith.constant 0 : index
    %c0_4 = arith.constant 0 : index
    %3 = vector.load %arg3[%c0_3, %c0_4] : memref<1x128xf32, #tpu.memory_space<vmem>>, vector<1x128xf32>
    %4 = vector.broadcast %3 : vector<1x128xf32> to vector<8x128xf32>
    %5 = arith.addf %2, %4 : vector<8x128xf32>
    %cst_5 = arith.constant 0.000000e+00 : f32
    %6 = vector.broadcast %cst_5 : f32 to vector<8x128xf32>
    %7 = arith.maximumf %5, %6 : vector<8x128xf32>
    %c0_6 = arith.constant 0 : index
    %c0_7 = arith.constant 0 : index
    %8 = vector.load %arg4[%c0_6, %c0_7] : memref<1x128xf32, #tpu.memory_space<vmem>>, vector<1x128xf32>
    %9 = vector.broadcast %8 : vector<1x128xf32> to vector<8x128xf32>
    %10 = arith.mulf %7, %9 : vector<8x128xf32>
    %cst_8 = arith.constant dense<0.000000e+00> : vector<8xf32>
    %11 = vector.multi_reduction <add>, %10, %cst_8 [1] : vector<8x128xf32> to vector<8xf32>
    %12 = vector.shape_cast %11 : vector<8xf32> to vector<8x1xf32>
    %c0_9 = arith.constant 0 : index
    %13 = memref.load %arg5[%c0_9] : memref<1xf32, #tpu.memory_space<smem>>
    %14 = vector.broadcast %13 : f32 to vector<8x1xf32>
    %15 = arith.addf %12, %14 : vector<8x1xf32>
    %16 = arith.negf %15 : vector<8x1xf32>
    %17 = math.exp %16 : vector<8x1xf32>
    %cst_10 = arith.constant 1.000000e+00 : f32
    %18 = vector.broadcast %cst_10 : f32 to vector<8x1xf32>
    %19 = arith.addf %18, %17 : vector<8x1xf32>
    %20 = arith.divf %18, %19 : vector<8x1xf32>
    %c0_11 = arith.constant 0 : index
    %c0_12 = arith.constant 0 : index
    %21 = vector.load %arg6[%c0_11, %c0_12] : memref<8x1xf32, #tpu.memory_space<vmem>>, vector<8x1xf32>
    tpu.vector_store %arg6[%c0_11, %c0_12], %20 {strides = array<i32>} : memref<8x1xf32, #tpu.memory_space<vmem>>, vector<8x1xf32>,
    return
  }
  func.func @transform_0(%arg0: i32) -> (i32, i32) {
    %c0_i32 = arith.constant 0 : i32
    %c0_i32_0 = arith.constant 0 : i32
    return %arg0, %c0_i32 : i32, i32
  }
  func.func @transform_1(%arg0: i32) -> (i32, i32) {
    %c0_i32 = arith.constant 0 : i32
    %c0_i32_0 = arith.constant 0 : i32
    %c0_i32_1 = arith.constant 0 : i32
    return %c0_i32, %c0_i32_0 : i32, i32
  }
  func.func @transform_2(%arg0: i32) -> (i32, i32) {
    %c0_i32 = arith.constant 0 : i32
    %c0_i32_0 = arith.constant 0 : i32
    %c0_i32_1 = arith.constant 0 : i32
    return %c0_i32, %c0_i32_0 : i32, i32
  }
  func.func @transform_3(%arg0: i32) -> (i32, i32) {
    %c0_i32 = arith.constant 0 : i32
    %c0_i32_0 = arith.constant 0 : i32
    %c0_i32_1 = arith.constant 0 : i32
    return %c0_i32, %c0_i32_0 : i32, i32
  }
  func.func @transform_4(%arg0: i32) -> i32 {
    %c0_i32 = arith.constant 0 : i32
    %c0_i32_0 = arith.constant 0 : i32
    return %c0_i32 : i32
  }
  func.func @transform_5(%arg0: i32) -> (i32, i32) {
    %c0_i32 = arith.constant 0 : i32
    %c0_i32_0 = arith.constant 0 : i32
    return %arg0, %c0_i32 : i32, i32
  }
}

</mosaic_0001>

<llo_original>
// kernel: tpu_custom_call.1
$region0: #{tpu_custom_call.1}
  #allocation0 [shape = 'u32[]', space=smem, size = 0x4, offset = 0x4, fixed_abs, tag = 'smem constant byte address 0x4 - core index']
  #allocation1 [shape = 'u32[72,128]{1,0:T(1,128)}', space=vmem, size = 0x9000, scoped, tag = 'internal scratch']
  #allocation2 [shape = 'f32[1]{0:T(128)S(6)}', space=smem, size = 0x200, scoped, tag = 'scoped memory for tpu_custom_call.1']
  %s0 = inlined_call_operand.hbm [shape: f32[8,42], index: 0, kind: input, shape index: {}]
  %s1 = inlined_call_operand.hbm [shape: f32[42,128], index: 1, kind: input, shape index: {}]
  %s2 = inlined_call_operand.vmem [shape: f32[1,128], index: 2, kind: input, shape index: {}]
  %s3 = inlined_call_operand.vmem [shape: f32[1,128], index: 3, kind: input, shape index: {}]
  %s4 = inlined_call_operand.<no memory space> [shape: f32[1], index: 4, kind: input, shape index: {}]
  %s5 = inlined_call_operand.vmem [shape: f32[8,1], index: 5, kind: output, shape index: {}]
  %s6 = sld [smem:[#allocation0]]
  $region38: #{tpu_custom_call.1} parent=0
    _
  %s8 = ssub.s32 1, %s6
  %s9 = scalar_select 0, %s8, %s6
  %10 = sst [smem:[#allocation2]] %s4
  $region1: #{tpu_custom_call.1} parent=0
    #allocation3 [shape = 'u8[4096]{0}', space=vmem, size = 0x1000, scoped, tag = 'input window, operand 0, single buffered']
    #allocation4 [shape = 's32[1]{0}', space=sflag, size = 0x4, scoped, tag = 'scoped memory for tpu_custom_call.1']
    #allocation5 [shape = 'u8[24576]{0}', space=vmem, size = 0x6000, scoped, tag = 'input window, operand 1, single buffered']
    #allocation6 [shape = 's32[1]{0}', space=sflag, size = 0x4, scoped, tag = 'scoped memory for tpu_custom_call.1']
    %11 = vsyncpa [#allocation4], 0
    %12 = vsyncpa [#allocation6], 0
    // Predicated region
    $region2: #{tpu_custom_call.1} parent=1 // pred_check
      _
    $region3: #{tpu_custom_call.1} parent=1 // pred_check_branch
      %14 = sbr.rel (0) target = $region5
    $region4: #{tpu_custom_call.1} parent=1 // pred_region
      %16 = vsyncadd [#allocation4], 0
      %s18 = sshll.u32 %s0, 4
      %s19 = int_to_ptr.hbm [resolvable:$true] %s18
      %s20 = sshll.u32 [#allocation3], 4
      %s21 = int_to_ptr.vmem [resolvable:$true] %s20
      %23 = dma.hbm_to_vmem [thread:$0]  %s19, 128, %s21, [#allocation4]
    $region5: #{tpu_custom_call.1} parent=1 // pred_fallthru
      _
    // Predicated region
    $region6: #{tpu_custom_call.1} parent=1 // pred_check
      _
    $region7: #{tpu_custom_call.1} parent=1 // pred_check_branch
      %25 = sbr.rel (0) target = $region9
    $region8: #{tpu_custom_call.1} parent=1 // pred_region
      %27 = vsyncadd [#allocation6], 0
      %s28 = sshll.u32 %s1, 4
      %s29 = int_to_ptr.hbm [resolvable:$true] %s28
      %s30 = sshll.u32 [#allocation5], 4
      %s31 = int_to_ptr.vmem [resolvable:$true] %s30
      %36 = dma.hbm_to_vmem [thread:$0]  %s29, 768, %s31, [#allocation6], 128, 128, 8
    $region9: #{tpu_custom_call.1} parent=1 // pred_fallthru
      _
    // Predicated region
    $region10: #{tpu_custom_call.1} parent=1 // pred_check
      _
    $region11: #{tpu_custom_call.1} parent=1 // pred_check_branch
      %38 = sbr.rel (0) target = $region13
    $region12: #{tpu_custom_call.1} parent=1 // pred_region
      _
    $region13: #{tpu_custom_call.1} parent=1 // pred_fallthru
      _
    // Predicated region
    $region14: #{tpu_custom_call.1} parent=1 // pred_check
      _
    $region15: #{tpu_custom_call.1} parent=1 // pred_check_branch
      %40 = sbr.rel (0) target = $region17
    $region16: #{tpu_custom_call.1} parent=1 // pred_region
      _
    $region17: #{tpu_custom_call.1} parent=1 // pred_fallthru
      _
    // Predicated region
    $region18: #{tpu_custom_call.1} parent=1 // pred_check
      _
    $region19: #{tpu_custom_call.1} parent=1 // pred_check_branch
      %42 = sbr.rel (0) target = $region21
    $region20: #{tpu_custom_call.1} parent=1 // pred_region
      _
    $region21: #{tpu_custom_call.1} parent=1 // pred_fallthru
      _
    // Predicated region
    $region22: #{tpu_custom_call.1} parent=1 // pred_check
      _
    $region23: #{tpu_custom_call.1} parent=1 // pred_check_branch
      %44 = sbr.rel (0) target = $region25
    $region24: #{tpu_custom_call.1} parent=1 // pred_region
      %46 = dma.done [#allocation4], 128
    $region25: #{tpu_custom_call.1} parent=1 // pred_fallthru
      _
    // Predicated region
    $region26: #{tpu_custom_call.1} parent=1 // pred_check
      _
    $region27: #{tpu_custom_call.1} parent=1 // pred_check_branch
      %48 = sbr.rel (0) target = $region29
    $region28: #{tpu_custom_call.1} parent=1 // pred_region
      %50 = dma.done [#allocation6], 768
    $region29: #{tpu_custom_call.1} parent=1 // pred_fallthru
      _
    %v51 = vld [vmem:[#allocation3] sm:$0xff]
    %v52 = vld [vmem:[#allocation5] sm:$0xff]
    %v53 = vld [vmem:[#allocation5 + $0x8] sm:$0xff]
    %v54 = vld [vmem:[#allocation5 + $0x10] sm:$0xff]
    %v55 = vld [vmem:[#allocation5 + $0x18] sm:$0xff]
    %v56 = vld [vmem:[#allocation5 + $0x20] sm:$0xff]
    %v57 = vld [vmem:[#allocation5 + $0x28] sm:$0x3]
    %v58 = vld [vmem:[%s2] sm:$0x1]
    %v60 = vperm.slane %v58, 0
    %vm62 = vcmask 343040
    %v64 = vsel %vm62, %v51, 0
    %vm66 = vcmask 1041408
    %v68 = vsel %vm66, %v57, 0
    %70 = vmatpush.msra.mxu0 0.0
    %71 = vmatpush.msra.mxu0 0.0
    %72 = vmatpush.msra.mxu0 0.0
    %73 = vmatpush.msra.mxu0 0.0
    %74 = vmatpush.msra.mxu0 0.0
    %75 = vmatpush.msra.mxu0 0.0
    %76 = vmatpush.msra.mxu0 0.0
    %77 = vmatpush.msra.mxu0 0.0
    %78 = vmatpush.msra.mxu0 0.0
    %79 = vmatpush.msra.mxu0 0.0
    %80 = vmatpush.msra.mxu0 %v68
    %81 = vmatpush.msra.mxu0 %v56
    %82 = vmatpush.msra.mxu0 %v55
    %83 = vmatpush.msra.mxu0 %v54
    %84 = vmatpush.msra.mxu0 %v53
    %85 = vmatpush.msra.mxu0 %v52
    %86 = vmatmul.f32.gmra.mxu0 %v64
    %v87 = vpop.f32.mrf.mxu0
    %v88 = vadd.f32 %v60, %v87
    %89 = vdwg.mxu0
    %v90 = vmax.f32 %v88, 0.0
    %v91 = vld [vmem:[%s3] sm:$0x1]
    %v93 = vperm.slane %v91, 0
    %v95 = vmul.f32 %v90, %v93
    %96 = vadd.xlane.f32.xlu0 %v95
    %v97 = vpop.xlane.xlu0 %96
    %s98 = sld [smem:[#allocation2]]
    %v99 = vstv %s98
    %v100 = vadd.f32 %v97, %v99
    %v101 = vxor.u32 %v100, 2147483648
    %v102 = vmul.f32 %v101, 1.442695
    %v103 = vpow.pop %v102
    %v104 = vadd.f32 %v103, 1.0
    %v105 = vrcp.pop %v104
    %v106 = vmul.f32 %v104, %v105
    %v107 = vsub.f32 1.0, %v106
    %v108 = vmul.f32 %v105, %v107
    %v109 = vadd.f32 %v105, %v108
    %vm110 = vweird.f32 %v104
    %vm111 = vweird.f32 %v105
    %vm112 = vmor %vm110, %vm111
    %v113 = vsel %vm112, %v105, %v109
    %v114 = vand.u32 2147483647, %v104
    %vm115 = vcmp.eq.f32.partialorder %v114, 8.507059e+37
    %v116 = vand.u32 %v104, 2147483648
    %v117 = vor.u32 1.1754944e-38, %v116
    %v118 = vsel %vm115, %v117, %v113
    %v119 = vmul.f32 1.0, %v118
    %vm120 = vcmask 7168
    %121 = vst.msk [vmem:[%s5] sm:$0xff] %vm120, %v119
    // Predicated region
    $region30: #{tpu_custom_call.1} parent=1 // pred_check
      _
    $region31: #{tpu_custom_call.1} parent=1 // pred_check_branch
      %123 = sbr.rel (0) target = $region33
    $region32: #{tpu_custom_call.1} parent=1 // pred_region
      _
    $region33: #{tpu_custom_call.1} parent=1 // pred_fallthru
      _
    // Predicated region
    $region34: #{tpu_custom_call.1} parent=1 // pred_check
      _
    $region35: #{tpu_custom_call.1} parent=1 // pred_check_branch
      %125 = sbr.rel (0) target = $region37
    $region36: #{tpu_custom_call.1} parent=1 // pred_region
      _
    $region37: #{tpu_custom_call.1} parent=1 // pred_fallthru
      _
    %126 = vsyncpa [#allocation4], 1
    %127 = vsyncpa [#allocation6], 1

</llo_original>
